<compile_context>
chip_gen: v5e
topology: v5e:2x2
jax: 0.10.0
libtpu: 0.0.40
codegen_flags: <defaults>
</compile_context>

<pallas_src>
import jax
import jax.numpy as jnp
from jax.experimental import pallas as pl
from jax.experimental.pallas import tpu as pltpu

d_model = 64
patch_size = 6


# --------------------------------------------------------------------------- #
# Kernels
# --------------------------------------------------------------------------- #
def _patch_embed_kernel(x_ref, w_ref, b_ref, o_ref):
    """C == 1 path: one MXU matmul per grid step.

    x_ref: (TB, p*W)      row-bands (p image rows x full width), f32
    w_ref: (p*W, TN)      block-diagonal weight column tile, bf16 (VMEM resident)
    b_ref: (1, TN)        bias tiled per patch column, f32
    o_ref: (TB, TN)       lane-dense output tile
    """
    o_ref[...] = (
        jnp.dot(x_ref[...].astype(jnp.bfloat16), w_ref[...],
                preferred_element_type=jnp.float32)
        + b_ref[...]
    ).astype(o_ref.dtype)


def _patch_embed_kernel_cred(x_ref, w_ref, b_ref, o_ref, acc_ref):
    """C > 1 path: channels fused as an innermost reduction grid axis.

    x_ref: (T_nh, p*W)    row-bands of ONE channel of ONE image, f32
    w_ref: (p*W, TN)      per-channel block-diagonal weight tile, bf16
    b_ref: (1, TN)        bias tile, f32
    o_ref: (T_nh, TN)     output tile (written only on the last channel)
    acc_ref: VMEM scratch (T_nh, TN) f32
    """
    c = pl.program_id(3)

    @pl.when(c == 0)
    def _():
        acc_ref[...] = jnp.zeros_like(acc_ref)

    acc_ref[...] += jnp.dot(x_ref[...].astype(jnp.bfloat16), w_ref[...],
                            preferred_element_type=jnp.float32)

    @pl.when(c == pl.num_programs(3) - 1)
    def _():
        o_ref[...] = (acc_ref[...] + b_ref[...]).astype(o_ref.dtype)


# --------------------------------------------------------------------------- #
# Host-side helpers
# --------------------------------------------------------------------------- #
def _build_block_diag_weight(weight, nw):
    """(d_model, C, p, p) conv weight -> (C, p*W, nw*d_model) block-diagonal.

    K-index ordering (kh, patch_col, kw) matches the flattened memory layout
    of a p-row band of the image, so the kernel needs no reshape/transpose and
    its output is already lane-dense (patch_col major, feature minor).
    """
    dm, C, p, _ = weight.shape
    wt = jnp.transpose(weight, (1, 2, 3, 0))            # (C, kh, kw, n)
    eye = jnp.eye(nw, dtype=wt.dtype)
    bw = jnp.einsum('chwn,jl->chjwln', wt, eye)          # (C, kh, j, kw, l, n)
    return bw.reshape(C, p * nw * p, nw * dm)            # (C, p*W, nw*d_model)


def _pick_tb(R, PW):
    """Row-band tile: as large as possible (HBM roofline needs >=512 rows),
    multiple of 8 (ideally 256/512 for the MXU), capped by a ~8 MiB/block
    VMEM budget (double-buffered it stays well under the 32 MiB scoped VMEM
    default on v5e/v6e/v7x)."""
    budget = 8 << 20
    cap = max(8, (budget // (PW * 4)) // 8 * 8)
    tb = min(R, 512, cap)
    if tb < R and tb % 8 != 0:
        tb = max(8, (tb // 8) * 8)
    return tb


def _pick_tn(NW, parallel_steps):
    """Output-column tile: multiple of 128 lanes (unmasked vst).  Use 256 for
    MXU alignment when there is already >=2-way grid parallelism; otherwise
    128 so small inputs still produce >=2 grid steps (v7x dual TensorCore)."""
    if NW % 256 == 0 and (parallel_steps >= 2 or NW >= 512):
        return 256
    if NW % 128 == 0:
        return 128
    return NW


# --------------------------------------------------------------------------- #
# Public wrapper
# --------------------------------------------------------------------------- #
def patch_embedding(x, weight, bias, out_dtype=jnp.float32):
    """x: (B, C, H, W) f32 (NCHW, like PyTorch).
    weight: (d_model, C, p, p), bias: (d_model,)   (nn.Conv2d parameter shapes)
    Returns (B, num_patches, d_model) == Conv2d -> flatten(2) -> transpose(1,2).
    Pass out_dtype=jnp.bfloat16 to halve the dominant HBM output stream."""
    B, C, H, W = x.shape
    p = patch_size
    assert H % p == 0 and W % p == 0
    nh, nw = H // p, W // p
    PW = p * W                   # one row-band of one channel, flattened
    NW = nw * d_model            # lane-dense output width

    bw = _build_block_diag_weight(weight, nw).astype(jnp.bfloat16)   # (C, PW, NW)
    bias_row = jnp.tile(bias.astype(jnp.float32), nw).reshape(1, NW)

    if C == 1:
        # Free reshape: NCHW with C==1 is already band-contiguous.
        R = B * nh
        bands = x.reshape(R, PW)
        TB = _pick_tb(R, PW)
        n_i = pl.cdiv(R, TB)
        TN = _pick_tn(NW, n_i)
        n_j = NW // TN

        out2 = pl.pallas_call(
            _patch_embed_kernel,
            out_shape=jax.ShapeDtypeStruct((R, NW), out_dtype),
            grid=(n_i, n_j),                       # j innermost: x block reused
            in_specs=[
                pl.BlockSpec((TB, PW), lambda i, j: (i, 0)),   # streamed bands
                pl.BlockSpec((PW, TN), lambda i, j: (0, j)),   # weight col tile
                pl.BlockSpec((1, TN), lambda i, j: (0, j)),    # bias col tile
            ],
            out_specs=pl.BlockSpec((TB, TN), lambda i, j: (i, j)),
            compiler_params=pltpu.CompilerParams(
                dimension_semantics=("parallel", "parallel")),
        )(bands, bw.reshape(PW, NW), bias_row)
        # (B*nh, nw*d_model) and (B, nh*nw, d_model) share the same layout.
        return out2.reshape(B, nh * nw, d_model)

    # ---- C > 1: no host transpose; channels are an in-kernel reduction. ----
    x4 = x.reshape(B, C, nh, PW)                 # free reshape of NCHW
    T_nh = nh if nh <= 256 else 256
    n_i = pl.cdiv(nh, T_nh)
    TN = _pick_tn(NW, B * n_i)
    n_j = NW // TN

    out3 = pl.pallas_call(
        _patch_embed_kernel_cred,
        out_shape=jax.ShapeDtypeStruct((B, nh, NW), out_dtype),
        grid=(B, n_i, n_j, C),                   # channel axis last (reduction)
        in_specs=[
            pl.BlockSpec((None, None, T_nh, PW), lambda b, i, j, c: (b, c, i, 0)),
            pl.BlockSpec((None, PW, TN), lambda b, i, j, c: (c, 0, j)),
            pl.BlockSpec((1, TN), lambda b, i, j, c: (0, j)),
        ],
        out_specs=pl.BlockSpec((None, T_nh, TN), lambda b, i, j, c: (b, i, j)),
        scratch_shapes=[pltpu.VMEM((T_nh, TN), jnp.float32)],
        compiler_params=pltpu.CompilerParams(
            dimension_semantics=("parallel", "parallel", "parallel", "arbitrary")),
    )(x4, bw, bias_row)
    return out3.reshape(B, nh * nw, d_model)


# --------------------------------------------------------------------------- #
# Self-test
# --------------------------------------------------------------------------- #
if __name__ == "__main__":
    key = jax.random.PRNGKey(0)
    k_x, k_w, k_b, k_x3, k_w3 = jax.random.split(key, 5)

    p = patch_size
    B = 2
    H = W = 4 * p        # 24 -> 4x4 = 16 patches per image

    def conv_ref(x, weight, bias):
        r = jax.lax.conv_general_dilated(
            x, weight, window_strides=(p, p), padding="VALID",
            dimension_numbers=("NCHW", "OIHW", "NCHW"))
        r = r + bias.reshape(1, d_model, 1, 1)
        return r.reshape(x.shape[0], d_model, -1).transpose(0, 2, 1)

    # Default module config (in_channels=1); bf16 output per perf feedback.
    x1 = jax.random.normal(k_x, (B, 1, H, W), dtype=jnp.float32)
    w1 = jax.random.normal(k_w, (d_model, 1, p, p), dtype=jnp.float32) * 0.05
    b1 = jax.random.normal(k_b, (d_model,), dtype=jnp.float32) * 0.05

    out1 = jax.block_until_ready(patch_embedding(x1, w1, b1, out_dtype=jnp.bfloat16))
    ref1 = conv_ref(x1, w1, b1)
    assert out1.shape == (B, (H // p) * (W // p), d_model)
    # bf16 operands / bf16 output with f32 MXU accumulation -> loose tolerance.
    assert jnp.allclose(out1.astype(jnp.float32), ref1, atol=3e-2, rtol=3e-2)

    # Multi-channel path: channels reduced inside the kernel (no host transpose).
    x3 = jax.random.normal(k_x3, (B, 3, H, W), dtype=jnp.float32)
    w3 = jax.random.normal(k_w3, (d_model, 3, p, p), dtype=jnp.float32) * 0.05
    out3 = jax.block_until_ready(patch_embedding(x3, w3, b1))   # f32 output
    ref3 = conv_ref(x3, w3, b1)
    assert jnp.allclose(out3, ref3, atol=3e-2, rtol=3e-2)

    print("KERNEL_OK")
</pallas_src>

<mosaic_0001>
module attributes {stable_mosaic.version = 11 : i64} {
  func.func @_patch_embed_kernel(%arg0: i32, %arg1: i32, %arg2: memref<8x144xf32, #tpu.memory_space<vmem>>, %arg3: memref<144x128xbf16, #tpu.memory_space<vmem>>, %arg4: memref<1x128xf32, #tpu.memory_space<vmem>>, %arg5: memref<8x128xbf16, #tpu.memory_space<vmem>>) attributes {dimension_semantics = [#tpu.dimension_semantics<parallel>, #tpu.dimension_semantics<parallel>], iteration_bounds = array<i64: 1, 2>, scalar_prefetch = 0 : i64, scratch_operands = 0 : i64, tpu.core_type = #tpu.core_type<tc>, window_params = [{transform_indices = @transform_0, window_bounds = array<i64: 8, 144>}, {transform_indices = @transform_1, window_bounds = array<i64: 144, 128>}, {transform_indices = @transform_2, window_bounds = array<i64: 1, 128>}, {transform_indices = @transform_3, window_bounds = array<i64: 8, 128>}]} {
    %c0 = arith.constant 0 : index
    %c0_0 = arith.constant 0 : index
    %0 = vector.load %arg2[%c0, %c0_0] : memref<8x144xf32, #tpu.memory_space<vmem>>, vector<8x144xf32>
    %1 = arith.truncf %0 : vector<8x144xf32> to vector<8x144xbf16>
    %c0_1 = arith.constant 0 : index
    %c0_2 = arith.constant 0 : index
    %2 = vector.load %arg3[%c0_1, %c0_2] : memref<144x128xbf16, #tpu.memory_space<vmem>>, vector<144x128xbf16>
    %cst = arith.constant dense<0.000000e+00> : vector<8x128xf32>
    %3 = tpu.matmul %1, %2, %cst {dimension_numbers = #tpu.dot_dimension_numbers<[1], [0], [0], [1], [0, 0, 1, 1], [], []>} : vector<8x144xbf16>, vector<144x128xbf16>, vector<8x128xf32> -> vector<8x128xf32>
    %c0_3 = arith.constant 0 : index
    %c0_4 = arith.constant 0 : index
    %4 = vector.load %arg4[%c0_3, %c0_4] : memref<1x128xf32, #tpu.memory_space<vmem>>, vector<1x128xf32>
    %5 = vector.broadcast %4 : vector<1x128xf32> to vector<8x128xf32>
    %6 = arith.addf %3, %5 : vector<8x128xf32>
    %7 = arith.truncf %6 : vector<8x128xf32> to vector<8x128xbf16>
    %c0_5 = arith.constant 0 : index
    %c0_6 = arith.constant 0 : index
    %8 = vector.load %arg5[%c0_5, %c0_6] : memref<8x128xbf16, #tpu.memory_space<vmem>>, vector<8x128xbf16>
    tpu.vector_store %arg5[%c0_5, %c0_6], %7 {strides = array<i32>} : memref<8x128xbf16, #tpu.memory_space<vmem>>, vector<8x128xbf16>,
    return
  }
  func.func @transform_0(%arg0: i32, %arg1: i32) -> (i32, i32) {
    %c0_i32 = arith.constant 0 : i32
    %c0_i32_0 = arith.constant 0 : i32
    return %arg0, %c0_i32 : i32, i32
  }
  func.func @transform_1(%arg0: i32, %arg1: i32) -> (i32, i32) {
    %c0_i32 = arith.constant 0 : i32
    %c0_i32_0 = arith.constant 0 : i32
    return %c0_i32, %arg1 : i32, i32
  }
  func.func @transform_2(%arg0: i32, %arg1: i32) -> (i32, i32) {
    %c0_i32 = arith.constant 0 : i32
    %c0_i32_0 = arith.constant 0 : i32
    return %c0_i32, %arg1 : i32, i32
  }
  func.func @transform_3(%arg0: i32, %arg1: i32) -> (i32, i32) {
    %c0_i32 = arith.constant 0 : i32
    return %arg0, %arg1 : i32, i32
  }
}

</mosaic_0001>

<llo_original>
// kernel: tpu_custom_call.1
$region0: #{tpu_custom_call.1}
  #allocation0 [shape = 'u32[]', space=smem, size = 0x4, offset = 0x4, fixed_abs, tag = 'smem constant byte address 0x4 - core index']
  #allocation1 [shape = 'u32[72,128]{1,0:T(1,128)}', space=vmem, size = 0x9000, scoped, tag = 'internal scratch']
  %s0 = inlined_call_operand.hbm [shape: f32[8,144], index: 0, kind: input, shape index: {}]
  %s1 = inlined_call_operand.hbm [shape: bf16[144,256], index: 1, kind: input, shape index: {}]
  %s2 = inlined_call_operand.hbm [shape: f32[1,256], index: 2, kind: input, shape index: {}]
  %s3 = inlined_call_operand.hbm [shape: bf16[8,256], index: 3, kind: output, shape index: {}]
  %s4 = sld [smem:[#allocation0]]
  $region57: #{tpu_custom_call.1} parent=0
    _
  %s6 = ssub.s32 1, %s4
  %s7 = scalar_select 0, %s6, %s4
  $region1: #{tpu_custom_call.1} parent=0
    #allocation2 [shape = 'u8[8192]{0}', space=vmem, size = 0x2000, scoped, tag = 'input window, operand 0, single buffered']
    #allocation3 [shape = 's32[2]{0}', space=sflag, size = 0x8, scoped, tag = 'scoped memory for tpu_custom_call.1']
    #allocation4 [shape = 's32[2]{0}', space=sflag, size = 0x8, scoped, tag = 'scoped memory for tpu_custom_call.1']
    #allocation5 [shape = 'u8[73728]{0}', space=vmem, size = 0x12000, scoped, tag = 'input window, operand 1']
    #allocation6 [shape = 's32[2]{0}', space=sflag, size = 0x8, scoped, tag = 'scoped memory for tpu_custom_call.1']
    #allocation7 [shape = 'u8[1024]{0}', space=vmem, size = 0x400, scoped, tag = 'input window, operand 2']
    #allocation8 [shape = 'u8[4096]{0}', space=vmem, size = 0x1000, scoped, tag = 'output window, operand 0']
    %8 = vsyncpa [#allocation3], 0
    %9 = vsyncpa [#allocation6], 0
    %s10 = scalar_lea.sflag [#allocation6], 1
    %11 = vsyncpa %s10, 0
    %12 = vsyncpa [#allocation4], 0
    %s13 = scalar_lea.sflag [#allocation4], 1
    %14 = vsyncpa %s13, 0
    loop: start=0, step=1, limit=4
    $region2: #{tpu_custom_call.1} parent=1 // loop_pre_header
      _
    $region3: #{tpu_custom_call.1} parent=1 // loop_header
      %s16 = sphi 0, %s20
      %p17 = scmp.ge.s32.totalorder %s16, 4
      %s23 = sphi 0, %s35
      %s24 = sphi 0, %s31
      %s25 = sphi 0, %s23
      %s26 = sphi 0, %s24
      %s27 = sphi 0, %s25
      %s28 = sphi 0, %s26
      %s38 = sphi 0, %s40
      %s41 = sphi 0, %s38
      %s42 = sphi 0, %s41
      %s58 = sphi 0, %s42
      %s64 = sphi 0, %s66
      %s67 = sphi 0, %s64
      %s68 = sphi 0, %s67
      %s84 = sphi 0, %s68
      %s90 = sphi 0, %s92
      %s93 = sphi 0, %s90
      %s94 = sphi 0, %s93
      %s110 = sphi 0, %s94
      %s118 = sphi 0, %s120
      %s121 = sphi 0, %s118
      %s122 = sphi 0, %s121
      %s138 = sphi 0, %s122
    $region4: #{tpu_custom_call.1} parent=1 // loop_header_branch
      %19 = sbr.rel (%p17) target = $region8
    $region5: #{tpu_custom_call.1} parent=1 // loop_body
      %s21 = ssub.s32 %s16, 1
      %s22 = ssub.s32 %s16, 2
      %s29 = sadd.s32 1, %s24
      %p30 = scmp.ge.s32.totalorder %s29, 2
      %s31 = scalar_select %p30, 0, %s29
      %s32 = sadd.s32 1, %s23
      %s33 = scalar_select %p30, %s32, %s23
      %p34 = scmp.ge.s32.totalorder %s33, 1
      %s35 = scalar_select %p34, 0, %s33
      %s36 = ssub.s32 %s23, %s35
      %p37 = scmp.eq.s32.totalorder %s36, 0
      %s39 = sadd.s32 %s38, 1
      %s40 = scalar_select %p37, %s38, %s39
      %p43 = pneg %p37
      %p44 = scmp.eq.s32.totalorder %s16, 1
      %p45 = por %p43, %p44
      %p46 = scmp.ne.s32.totalorder %s38, %s41
      %p47 = scmp.eq.s32.totalorder %s16, 0
      %p48 = por %p46, %p47
      %p49 = scmp.ne.s32.totalorder %s38, %s41
      %p50 = scmp.eq.s32.totalorder %s21, 1
      %p51 = por %p49, %p50
      %p52 = scmp.ne.s32.totalorder %s41, %s42
      %p53 = scmp.eq.s32.totalorder %s21, 0
      %p54 = por %p52, %p53
      %p55 = scmp.ne.s32.totalorder %s41, %s42
      %p56 = scmp.eq.s32.totalorder %s22, 1
      %p57 = por %p55, %p56
      %p59 = scmp.ne.s32.totalorder %s42, %s58
      %p60 = scmp.eq.s32.totalorder %s22, 0
      %p61 = por %p59, %p60
      %s62 = ssub.s32 %s24, %s31
      %p63 = scmp.eq.s32.totalorder %s62, 0
      %s65 = sadd.s32 %s64, 1
      %s66 = scalar_select %p63, %s64, %s65
      %p69 = pneg %p63
      %p70 = scmp.eq.s32.totalorder %s16, 1
      %p71 = por %p69, %p70
      %p72 = scmp.ne.s32.totalorder %s64, %s67
      %p73 = scmp.eq.s32.totalorder %s16, 0
      %p74 = por %p72, %p73
      %p75 = scmp.ne.s32.totalorder %s64, %s67
      %p76 = scmp.eq.s32.totalorder %s21, 1
      %p77 = por %p75, %p76
      %p78 = scmp.ne.s32.totalorder %s67, %s68
      %p79 = scmp.eq.s32.totalorder %s21, 0
      %p80 = por %p78, %p79
      %p81 = scmp.ne.s32.totalorder %s67, %s68
      %p82 = scmp.eq.s32.totalorder %s22, 1
      %p83 = por %p81, %p82
      %p85 = scmp.ne.s32.totalorder %s68, %s84
      %p86 = scmp.eq.s32.totalorder %s22, 0
      %p87 = por %p85, %p86
      %s88 = ssub.s32 %s24, %s31
      %p89 = scmp.eq.s32.totalorder %s88, 0
      %s91 = sadd.s32 %s90, 1
      %s92 = scalar_select %p89, %s90, %s91
      %p95 = pneg %p89
      %p96 = scmp.eq.s32.totalorder %s16, 1
      %p97 = por %p95, %p96
      %p98 = scmp.ne.s32.totalorder %s90, %s93
      %p99 = scmp.eq.s32.totalorder %s16, 0
      %p100 = por %p98, %p99
      %p101 = scmp.ne.s32.totalorder %s90, %s93
      %p102 = scmp.eq.s32.totalorder %s21, 1
      %p103 = por %p101, %p102
      %p104 = scmp.ne.s32.totalorder %s93, %s94
      %p105 = scmp.eq.s32.totalorder %s21, 0
      %p106 = por %p104, %p105
      %p107 = scmp.ne.s32.totalorder %s93, %s94
      %p108 = scmp.eq.s32.totalorder %s22, 1
      %p109 = por %p107, %p108
      %p111 = scmp.ne.s32.totalorder %s94, %s110
      %p112 = scmp.eq.s32.totalorder %s22, 0
      %p113 = por %p111, %p112
      %s114 = ssub.s32 %s23, %s35
      %s115 = ssub.s32 %s24, %s31
      %s116 = sor.u32 %s114, %s115
      %p117 = scmp.eq.s32.totalorder %s116, 0
      %s119 = sadd.s32 %s118, 1
      %s120 = scalar_select %p117, %s118, %s119
      %p123 = pneg %p117
      %p124 = scmp.eq.s32.totalorder %s16, 1
      %p125 = por %p123, %p124
      %p126 = scmp.ne.s32.totalorder %s118, %s121
      %p127 = scmp.eq.s32.totalorder %s16, 0
      %p128 = por %p126, %p127
      %p129 = scmp.ne.s32.totalorder %s118, %s121
      %p130 = scmp.eq.s32.totalorder %s21, 1
      %p131 = por %p129, %p130
      %p132 = scmp.ne.s32.totalorder %s121, %s122
      %p133 = scmp.eq.s32.totalorder %s21, 0
      %p134 = por %p132, %p133
      %p135 = scmp.ne.s32.totalorder %s121, %s122
      %p136 = scmp.eq.s32.totalorder %s22, 1
      %p137 = por %p135, %p136
      %p139 = scmp.ne.s32.totalorder %s122, %s138
      %p140 = scmp.eq.s32.totalorder %s22, 0
      %p141 = por %p139, %p140
      %p142 = scmp.le.s32.totalorder 1, %s16
      %p143 = scmp.lt.s32.totalorder %s16, 3
      %p144 = pnand %p142, %p143
      %p145 = pneg %p144
      // Predicated region
      $region9: #{tpu_custom_call.1} parent=5 // pred_check
        _
      $region10: #{tpu_custom_call.1} parent=5 // pred_check_branch
        %147 = sbr.rel (%p144) target = $region12
      $region11: #{tpu_custom_call.1} parent=5 // pred_region
        %s148 = ssub.s32 %s16, 1
        // Predicated region
        $region13: #{tpu_custom_call.1} parent=11 // pred_check
          %p149 = pneg %p54
        $region14: #{tpu_custom_call.1} parent=11 // pred_check_branch
          %151 = sbr.rel (%p149) target = $region16
        $region15: #{tpu_custom_call.1} parent=11 // pred_region
          %153 = vsyncadd [#allocation3], 0
          %s154 = smul.addr %s25, 2
          %s155 = smul.addr %s154, 8
          %s156 = scalar_lea.hbm %s0, %s155
          %s158 = sshll.u32 %s156, 4
          %s159 = int_to_ptr.hbm [resolvable:$true] %s158
          %s160 = sshll.u32 [#allocation2], 4
          %s161 = int_to_ptr.vmem [resolvable:$true] %s160
          %163 = dma.hbm_to_vmem [thread:$0]  %s159, 256, %s161, [#allocation3]
        $region16: #{tpu_custom_call.1} parent=11 // pred_fallthru
          _
      $region12: #{tpu_custom_call.1} parent=5 // pred_fallthru
        _
      %p164 = scmp.lt.s32.totalorder %s16, 2
      // Predicated region
      $region17: #{tpu_custom_call.1} parent=5 // pred_check
        %p165 = pneg %p164
      $region18: #{tpu_custom_call.1} parent=5 // pred_check_branch
        %167 = sbr.rel (%p165) target = $region20
      $region19: #{tpu_custom_call.1} parent=5 // pred_region
        // Predicated region
        $region21: #{tpu_custom_call.1} parent=19 // pred_check
          %p168 = pneg %p74
        $region22: #{tpu_custom_call.1} parent=19 // pred_check_branch
          %170 = sbr.rel (%p168) target = $region24
        $region23: #{tpu_custom_call.1} parent=19 // pred_region
          %s171 = sand.u32 %s16, 1
          %s172 = scalar_lea.sflag [#allocation6], %s171
          %s173 = sand.u32 %s64, 1
          %s174 = smul.addr %s173, 72
          %s175 = scalar_lea.vmem [#allocation5], %s174
          %177 = vsyncadd %s172, 0
          %s178 = smul.addr %s24, 4
          %s179 = scalar_lea.hbm %s1, %s178
          %s180 = sshll.u32 %s179, 4
          %s181 = int_to_ptr.hbm [resolvable:$true] %s180
          %s182 = sshll.u32 %s175, 4
          %s183 = int_to_ptr.vmem [resolvable:$true] %s182
          %188 = dma.hbm_to_vmem [thread:$0]  %s181, 1152, %s183, %s172, 128, 64, 4
        $region24: #{tpu_custom_call.1} parent=19 // pred_fallthru
          _
        // Predicated region
        $region25: #{tpu_custom_call.1} parent=19 // pred_check
          %p189 = pneg %p100
        $region26: #{tpu_custom_call.1} parent=19 // pred_check_branch
          %191 = sbr.rel (%p189) target = $region28
        $region27: #{tpu_custom_call.1} parent=19 // pred_region
          %s192 = sand.u32 %s16, 1
          %s193 = scalar_lea.sflag [#allocation6], %s192
          %s194 = sand.u32 %s90, 1
          %s195 = scalar_lea.vmem [#allocation7], %s194
          %197 = vsyncadd %s193, 0
          %s198 = scalar_lea.hbm %s2, %s24
          %s200 = sshll.u32 %s198, 4
          %s201 = int_to_ptr.hbm [resolvable:$true] %s200
          %s202 = sshll.u32 %s195, 4
          %s203 = int_to_ptr.vmem [resolvable:$true] %s202
          %205 = dma.hbm_to_vmem [thread:$0]  %s201, 16, %s203, %s193
        $region28: #{tpu_custom_call.1} parent=19 // pred_fallthru
          _
      $region20: #{tpu_custom_call.1} parent=5 // pred_fallthru
        _
      %p206 = scmp.le.s32.totalorder 1, %s16
      %p207 = scmp.lt.s32.totalorder %s16, 3
      %p208 = pnand %p206, %p207
      %p209 = pneg %p208
      // Predicated region
      $region29: #{tpu_custom_call.1} parent=5 // pred_check
        _
      $region30: #{tpu_custom_call.1} parent=5 // pred_check_branch
        %211 = sbr.rel (%p208) target = $region32
      $region31: #{tpu_custom_call.1} parent=5 // pred_region
        %s212 = ssub.s32 %s16, 1
        // Predicated region
        $region33: #{tpu_custom_call.1} parent=31 // pred_check
          %p213 = pneg %p54
        $region34: #{tpu_custom_call.1} parent=31 // pred_check_branch
          %215 = sbr.rel (%p213) target = $region36
        $region35: #{tpu_custom_call.1} parent=31 // pred_region
          %217 = dma.done [#allocation3], 256
        $region36: #{tpu_custom_call.1} parent=31 // pred_fallthru
          _
        %s218 = sand.u32 %s21, 1
        %s219 = scalar_lea.sflag [#allocation6], %s218
        %s220 = sand.u32 %s67, 1
        %s221 = smul.addr %s220, 72
        %s222 = scalar_lea.vmem [#allocation5], %s221
        // Predicated region
        $region37: #{tpu_custom_call.1} parent=31 // pred_check
          %p223 = pneg %p80
        $region38: #{tpu_custom_call.1} parent=31 // pred_check_branch
          %225 = sbr.rel (%p223) target = $region40
        $region39: #{tpu_custom_call.1} parent=31 // pred_region
          %227 = dma.done %s219, 1152
        $region40: #{tpu_custom_call.1} parent=31 // pred_fallthru
          _
        %s228 = sand.u32 %s21, 1
        %s229 = scalar_lea.sflag [#allocation6], %s228
        %s230 = sand.u32 %s93, 1
        %s231 = scalar_lea.vmem [#allocation7], %s230
        // Predicated region
        $region41: #{tpu_custom_call.1} parent=31 // pred_check
          %p232 = pneg %p106
        $region42: #{tpu_custom_call.1} parent=31 // pred_check_branch
          %234 = sbr.rel (%p232) target = $region44
        $region43: #{tpu_custom_call.1} parent=31 // pred_region
          %236 = dma.done %s229, 16
        $region44: #{tpu_custom_call.1} parent=31 // pred_fallthru
          _
        %p237 = pneg %p54
        %p238 = pneg %p51
        %s239 = sand.u32 %s21, 1
        %s240 = scalar_lea.sflag [#allocation6], %s239
        %s241 = sand.u32 %s67, 1
        %s242 = smul.addr %s241, 72
        %s243 = scalar_lea.vmem [#allocation5], %s242
        %p244 = pneg %p80
        %p245 = pneg %p77
        %s246 = sand.u32 %s21, 1
        %s247 = scalar_lea.sflag [#allocation6], %s246
        %s248 = sand.u32 %s93, 1
        %s249 = scalar_lea.vmem [#allocation7], %s248
        %p250 = pneg %p106
        %p251 = pneg %p103
        %p252 = pneg %p134
        %p253 = pneg %p131
        %s254 = sand.u32 %s121, 1
        %s255 = scalar_lea.sflag [#allocation4], %s254
        %s256 = sand.u32 %s121, 1
        %s257 = smul.addr %s256, 4
        %s258 = scalar_lea.vmem [#allocation8], %s257
        %v260 = vld [vmem:[#allocation2] sm:$0xff]
        %v261 = vld [vmem:[#allocation2 + $0x8] sm:$0xff]
        %v262 = vpack.c.bf16 %v260, %v260
        %v263 = vpack.c.bf16 %v261, %v261
        %v264 = vld [vmem:[%s222] sm:$0xf]
        %v265 = vld [vmem:[%s222 + $0x4] sm:$0xf]
        %v266 = vld [vmem:[%s222 + $0x8] sm:$0xf]
        %v267 = vld [vmem:[%s222 + $0xc] sm:$0xf]
        %v268 = vld [vmem:[%s222 + $0x10] sm:$0xf]
        %v269 = vld [vmem:[%s222 + $0x14] sm:$0xf]
        %v270 = vld [vmem:[%s222 + $0x18] sm:$0xf]
        %v271 = vld [vmem:[%s222 + $0x1c] sm:$0xf]
        %v272 = vld [vmem:[%s222 + $0x20] sm:$0xf]
        %v273 = vld [vmem:[%s222 + $0x24] sm:$0xf]
        %v274 = vld [vmem:[%s222 + $0x28] sm:$0xf]
        %v275 = vld [vmem:[%s222 + $0x2c] sm:$0xf]
        %v276 = vld [vmem:[%s222 + $0x30] sm:$0xf]
        %v277 = vld [vmem:[%s222 + $0x34] sm:$0xf]
        %v278 = vld [vmem:[%s222 + $0x38] sm:$0xf]
        %v279 = vld [vmem:[%s222 + $0x3c] sm:$0xf]
        %v280 = vld [vmem:[%s222 + $0x40] sm:$0xf]
        %v281 = vld [vmem:[%s222 + $0x44] sm:$0xf]
        %v282 = vld [vmem:[%s231] sm:$0x1]
        %v284 = vperm.slane %v282, 0
        %v304 = vunpack.c.l.b16 %v264
        %v305 = vunpack.c.l.b16 %v265
        %v306 = vunpack.c.l.b16 %v266
        %v307 = vunpack.c.l.b16 %v267
        %v308 = vunpack.c.l.b16 %v268
        %v309 = vunpack.c.l.b16 %v269
        %v310 = vunpack.c.l.b16 %v270
        %v311 = vunpack.c.l.b16 %v271
        %v312 = vunpack.c.l.b16 %v272
        %v313 = vunpack.c.l.b16 %v273
        %v314 = vunpack.c.l.b16 %v274
        %v315 = vunpack.c.l.b16 %v275
        %v316 = vunpack.c.l.b16 %v276
        %v317 = vunpack.c.l.b16 %v277
        %v318 = vunpack.c.l.b16 %v278
        %v319 = vunpack.c.l.b16 %v279
        %v320 = vunpack.c.l.b16 %v280
        %v321 = vunpack.c.l.b16 %v281
        %v322 = vpack.c.b16 %v305, %v304
        %v323 = vpack.c.b16 %v307, %v306
        %v324 = vpack.c.b16 %v309, %v308
        %v325 = vpack.c.b16 %v311, %v310
        %v326 = vpack.c.b16 %v313, %v312
        %v327 = vpack.c.b16 %v315, %v314
        %v328 = vpack.c.b16 %v317, %v316
        %v329 = vpack.c.b16 %v319, %v318
        %v330 = vpack.c.b16 %v321, %v320
        %vm340 = vcmask 130048
        %v342 = vsel %vm340, %v263, 0
        %344 = vmatpush.bf16.msra.mxu0 %v329
        %345 = vmatpush.bf16.msra.mxu0 %v328
        %346 = vmatpush.bf16.msra.mxu0 %v327
        %347 = vmatpush.bf16.msra.mxu0 %v326
        %348 = vmatpush.bf16.msra.mxu0 %v325
        %349 = vmatpush.bf16.msra.mxu0 %v324
        %350 = vmatpush.bf16.msra.mxu0 %v323
        %351 = vmatpush.bf16.msra.mxu0 %v322
        %352 = vmatmul.bf16.gmra.mxu0 %v262
        %v353 = vpop.f32.mrf.mxu0
        %v354 = vadd.f32 %v284, %v353
        %v355 = vpop.f32.mrf.mxu0
        %356 = vdwg.mxu0
        %357 = vmatpush.bf16.msra.mxu0 0
        %358 = vmatpush.bf16.msra.mxu0 0
        %359 = vmatpush.bf16.msra.mxu0 0
        %360 = vmatpush.bf16.msra.mxu0 0
        %361 = vmatpush.bf16.msra.mxu0 0
        %362 = vmatpush.bf16.msra.mxu0 0
        %363 = vmatpush.bf16.msra.mxu0 0
        %364 = vmatpush.bf16.msra.mxu0 %v330
        %365 = vmatmul.bf16.gmra.mxu0 %v342
        %v366 = vpop.f32.mrf.mxu0
        %v367 = vadd.f32 %v354, %v366
        %v368 = vpop.f32.mrf.mxu0
        %369 = vdwg.mxu0
        %v370 = vpack.c.bf16 %v367, %v367
        %371 = vst [vmem:[%s258] sm:$0xf] %v370
        %s372 = sand.u32 %s121, 1
        %s373 = scalar_lea.sflag [#allocation4], %s372
        %s374 = sand.u32 %s121, 1
        %s375 = smul.addr %s374, 4
        %s376 = scalar_lea.vmem [#allocation8], %s375
        // Predicated region
        $region45: #{tpu_custom_call.1} parent=31 // pred_check
          %p377 = pneg %p131
        $region46: #{tpu_custom_call.1} parent=31 // pred_check_branch
          %379 = sbr.rel (%p377) target = $region48
        $region47: #{tpu_custom_call.1} parent=31 // pred_region
          %381 = vsyncadd %s373, 0
          %s382 = smul.addr %s25, 2
          %s383 = sadd.s32 %s26, %s382
          %s384 = smul.addr %s383, 4
          %s385 = scalar_lea.hbm %s3, %s384
          %s387 = sshll.u32 %s376, 4
          %s388 = int_to_ptr.vmem [resolvable:$true] %s387
          %s389 = sshll.u32 %s385, 4
          %s390 = int_to_ptr.hbm [resolvable:$true] %s389
          %392 = dma.vmem_to_hbm [thread:$0]  %s388, 64, %s390, %s373
        $region48: #{tpu_custom_call.1} parent=31 // pred_fallthru
          _
      $region32: #{tpu_custom_call.1} parent=5 // pred_fallthru
        _
      %p393 = scmp.le.s32.totalorder 2, %s16
      // Predicated region
      $region49: #{tpu_custom_call.1} parent=5 // pred_check
        %p394 = pneg %p393
      $region50: #{tpu_custom_call.1} parent=5 // pred_check_branch
        %396 = sbr.rel (%p394) target = $region52
      $region51: #{tpu_custom_call.1} parent=5 // pred_region
        %s397 = ssub.s32 %s16, 2
        // Predicated region
        $region53: #{tpu_custom_call.1} parent=51 // pred_check
          %p398 = pneg %p137
        $region54: #{tpu_custom_call.1} parent=51 // pred_check_branch
          %400 = sbr.rel (%p398) target = $region56
        $region55: #{tpu_custom_call.1} parent=51 // pred_region
          %s401 = sand.u32 %s122, 1
          %s402 = scalar_lea.sflag [#allocation4], %s401
          %s403 = sand.u32 %s122, 1
          %s404 = smul.addr %s403, 4
          %s405 = scalar_lea.vmem [#allocation8], %s404
          %407 = dma.done %s402, 64
        $region56: #{tpu_custom_call.1} parent=51 // pred_fallthru
          _
      $region52: #{tpu_custom_call.1} parent=5 // pred_fallthru
        _
    $region6: #{tpu_custom_call.1} parent=1 // loop_footer
      %s20 = sadd.s32 1, %s16
    $region7: #{tpu_custom_call.1} parent=1 // loop_footer_branch
      %15 = sbr.rel target = $region3
    $region8: #{tpu_custom_call.1} parent=1 // loop_exit
      _
    %408 = vsyncpa [#allocation3], 1
    %s409 = scalar_lea.sflag [#allocation3], 1
    %410 = vsyncpa %s409, 1
    %411 = vsyncpa [#allocation6], 1
    %s412 = scalar_lea.sflag [#allocation6], 1
    %413 = vsyncpa %s412, 1
    %414 = vsyncpa [#allocation4], 1
    %s415 = scalar_lea.sflag [#allocation4], 1
    %416 = vsyncpa %s415, 1

</llo_original>
